<compile_context>
chip_gen: v7x
topology: tpu7x:2x2x1
jax: 0.10.0
libtpu: 0.0.40
codegen_flags: <defaults>
</compile_context>

<pallas_src>
import jax
import jax.numpy as jnp
from jax.experimental import pallas as pl
from jax.experimental.pallas import tpu as pltpu

LANE = 128
SUBLANE = 8

WIDE_COLS = 8 * LANE          # 1024-wide slab -> full-width unmasked stores
NARROW_COLS = LANE            # fallback for tiny tensors (minimize padding)

TARGET_BLOCK_BYTES = 4 * 1024 * 1024       # ~4 MiB per block buffer
VMEM_LIMIT_BYTES = 32 * 1024 * 1024        # in+out double-buffered fits easily


def _identity_kernel(x_ref, o_ref):
    # StraightThrough: output = input (pure streaming copy).
    o_ref[...] = x_ref[...]


def _round_down_multiple(n, m):
    return max(m, (n // m) * m)


def straight_through(x):
    """Pallas implementation of StraightThrough.forward (identity)."""
    orig_shape = x.shape
    total = x.size
    if total == 0:
        return x

    flat = x.reshape(-1)

    # Slab width: wide (1024 lanes) whenever the pad granularity (8*1024
    # elements) is negligible relative to the tensor, else 128 lanes.
    cols = WIDE_COLS if total >= SUBLANE * WIDE_COLS else NARROW_COLS
    tile = SUBLANE * cols
    pad = (-total) % tile
    if pad:
        flat = jnp.pad(flat, (0, pad))
    rows = (total + pad) // cols            # always a multiple of 8
    x2 = flat.reshape(rows, cols)

    # Block rows: ~TARGET_BLOCK_BYTES per buffer, rounded down to a multiple
    # of 8 (or the full row extent for small tensors) so the (8,128) tiling
    # constraint always holds. Ragged tail handled by pl.cdiv + masking.
    itemsize = jnp.dtype(x.dtype).itemsize
    max_rows = _round_down_multiple(TARGET_BLOCK_BYTES // (cols * itemsize), SUBLANE)
    block_rows = min(rows, max_rows)
    grid = (pl.cdiv(rows, block_rows),)

    out2 = pl.pallas_call(
        _identity_kernel,
        out_shape=jax.ShapeDtypeStruct((rows, cols), x.dtype),
        grid=grid,
        in_specs=[pl.BlockSpec((block_rows, cols), lambda i: (i, 0))],
        out_specs=pl.BlockSpec((block_rows, cols), lambda i: (i, 0)),
        compiler_params=pltpu.CompilerParams(
            dimension_semantics=("parallel",),
            vmem_limit_bytes=VMEM_LIMIT_BYTES,
        ),
    )(x2)

    out = out2.reshape(-1)
    if pad:
        out = out[:total]
    return out.reshape(orig_shape)


if __name__ == "__main__":
    key = jax.random.PRNGKey(0)
    # Small NCHW activation tensor, as fed through the StraightThrough module.
    x = jax.random.normal(key, (2, 4, 16, 16), dtype=jnp.float32) * 3.0

    y = straight_through(x)
    y = jax.block_until_ready(y)

    # Reference: identity.
    assert y.shape == x.shape and y.dtype == x.dtype
    assert jnp.array_equal(y, x), "mismatch vs identity reference"

    # Also exercise a larger, wide-slab, ragged-tail path once for coverage.
    x_big = jax.random.normal(key, (2, 64, 57, 57), dtype=jnp.bfloat16)
    y_big = jax.block_until_ready(straight_through(x_big))
    assert y_big.shape == x_big.shape and y_big.dtype == x_big.dtype
    assert jnp.array_equal(y_big, x_big), "mismatch vs identity reference (big)"

    print("KERNEL_OK")
</pallas_src>

<mosaic_0001>
module attributes {stable_mosaic.version = 11 : i64} {
  func.func @_identity_kernel(%arg0: i32, %arg1: memref<16x128xf32, #tpu.memory_space<vmem>>, %arg2: memref<16x128xf32, #tpu.memory_space<vmem>>) attributes {dimension_semantics = [#tpu.dimension_semantics<parallel>], iteration_bounds = array<i64: 1>, scalar_prefetch = 0 : i64, scratch_operands = 0 : i64, tpu.core_type = #tpu.core_type<tc>, window_params = [{transform_indices = @transform_0, window_bounds = array<i64: 16, 128>}, {transform_indices = @transform_1, window_bounds = array<i64: 16, 128>}]} {
    %c0 = arith.constant 0 : index
    %c0_0 = arith.constant 0 : index
    %0 = vector.load %arg1[%c0, %c0_0] : memref<16x128xf32, #tpu.memory_space<vmem>>, vector<16x128xf32>
    %c0_1 = arith.constant 0 : index
    %c0_2 = arith.constant 0 : index
    %1 = vector.load %arg2[%c0_1, %c0_2] : memref<16x128xf32, #tpu.memory_space<vmem>>, vector<16x128xf32>
    tpu.vector_store %arg2[%c0_1, %c0_2], %0 {strides = array<i32>} : memref<16x128xf32, #tpu.memory_space<vmem>>, vector<16x128xf32>,
    return
  }
  func.func @transform_0(%arg0: i32) -> (i32, i32) {
    %c0_i32 = arith.constant 0 : i32
    %c0_i32_0 = arith.constant 0 : i32
    return %arg0, %c0_i32 : i32, i32
  }
  func.func @transform_1(%arg0: i32) -> (i32, i32) {
    %c0_i32 = arith.constant 0 : i32
    %c0_i32_0 = arith.constant 0 : i32
    return %arg0, %c0_i32 : i32, i32
  }
}

</mosaic_0001>

<llo_original>
// kernel: tpu_custom_call.1
$region0: #{tpu_custom_call.1}
  #allocation0 [shape = 'u32[]', space=smem, size = 0x4, offset = 0x4, fixed_abs, tag = 'smem constant byte address 0x4 - core index']
  #allocation1 [shape = 'u32[144,128]{1,0:T(1,128)}', space=vmem, size = 0x12000, scoped, tag = 'internal scratch']
  %s0 = inlined_call_operand.hbm [shape: f32[16,128], index: 0, kind: input, shape index: {}]
  %s1 = inlined_call_operand.hbm [shape: f32[16,128], index: 1, kind: output, shape index: {}]
  %s2 = sld [smem:[#allocation0]]
  $region18: #{tpu_custom_call.1} parent=0
    _
  %s4 = ssub.s32 1, %s2
  %s5 = scalar_select 0, %s4, %s2
  $region1: #{tpu_custom_call.1} parent=0
    #allocation2 [shape = 'u8[8192]{0}', space=vmem, size = 0x2000, scoped, tag = 'input window, operand 0, single buffered']
    #allocation3 [shape = 's32[1]{0}', space=sflag, size = 0x4, scoped, tag = 'scoped memory for tpu_custom_call.1']
    #allocation4 [shape = 's32[1]{0}', space=sflag, size = 0x4, scoped, tag = 'scoped memory for tpu_custom_call.1']
    #allocation5 [shape = 'u8[8192]{0}', space=vmem, size = 0x2000, scoped, tag = 'output window, operand 0, single buffered']
    %6 = vsyncpa [#allocation3], 0
    %7 = vsyncpa [#allocation4], 0
    // Predicated region
    $region2: #{tpu_custom_call.1} parent=1 // pred_check
      _
    $region3: #{tpu_custom_call.1} parent=1 // pred_check_branch
      %9 = sbr.rel (0) target = $region5
    $region4: #{tpu_custom_call.1} parent=1 // pred_region
      %s11 = ssub.s32 256, 256
      %12 = vsyncadd [#allocation3], %s11
      %s13 = sshll.u32 [#allocation2], 4
      %s14 = int_to_ptr.vmem [resolvable:$true] %s13
      %19 = dma.hbm_to_vmem [thread:$0]  %s0, 256, %s14, [#allocation3], 128, 128, 8
    $region5: #{tpu_custom_call.1} parent=1 // pred_fallthru
      _
    // Predicated region
    $region6: #{tpu_custom_call.1} parent=1 // pred_check
      _
    $region7: #{tpu_custom_call.1} parent=1 // pred_check_branch
      %21 = sbr.rel (0) target = $region9
    $region8: #{tpu_custom_call.1} parent=1 // pred_region
      %22 = dma.done [#allocation3], 256
    $region9: #{tpu_custom_call.1} parent=1 // pred_fallthru
      _
    %v23 = vld [vmem:[#allocation2] sm:$0xff]
    %v24 = vld [vmem:[#allocation2 + $0x8] sm:$0xff]
    %25 = vst [vmem:[#allocation5] sm:$0xff] %v23
    %26 = vst [vmem:[#allocation5 + $0x8] sm:$0xff] %v24
    // Predicated region
    $region10: #{tpu_custom_call.1} parent=1 // pred_check
      _
    $region11: #{tpu_custom_call.1} parent=1 // pred_check_branch
      %28 = sbr.rel (0) target = $region13
    $region12: #{tpu_custom_call.1} parent=1 // pred_region
      %s30 = ssub.s32 256, 256
      %31 = vsyncadd [#allocation4], %s30
      %s32 = sshll.u32 [#allocation5], 4
      %s33 = int_to_ptr.vmem [resolvable:$true] %s32
      %38 = dma.vmem_to_hbm [thread:$0]  %s33, 256, %s1, [#allocation4], 128, 128, 8
    $region13: #{tpu_custom_call.1} parent=1 // pred_fallthru
      _
    // Predicated region
    $region14: #{tpu_custom_call.1} parent=1 // pred_check
      _
    $region15: #{tpu_custom_call.1} parent=1 // pred_check_branch
      %40 = sbr.rel (0) target = $region17
    $region16: #{tpu_custom_call.1} parent=1 // pred_region
      %41 = dma.done [#allocation4], 256
    $region17: #{tpu_custom_call.1} parent=1 // pred_fallthru
      _
    %42 = vsyncpa [#allocation3], 1
    %43 = vsyncpa [#allocation4], 1

</llo_original>
